<compile_context>
chip_gen: v7x
topology: tpu7x:2x2x1
jax: 0.10.0
libtpu: 0.0.40
codegen_flags: <defaults>
</compile_context>

<pallas_src>
import jax
import jax.numpy as jnp
from jax.experimental import pallas as pl
from jax.experimental.pallas import tpu as pltpu


def _cbam_kernel(x_ref, w1t_ref, w2t_ref, toep_ref, o_ref):
    """Processes one (Bb, C, L) batch block per grid step."""
    x = x_ref[...].astype(jnp.float32)                 # (Bb, C, L)
    bb = x.shape[0]
    w1t = w1t_ref[...].astype(jnp.float32)             # (C, Cr)
    w2t = w2t_ref[...].astype(jnp.float32)             # (Cr, C)
    toep = toep_ref[...].astype(jnp.float32)           # (2L, L)

    # ---------------- Channel attention ----------------
    # Stack the avg/max pooled vectors so each MLP layer is one matmul.
    avg_p = jnp.mean(x, axis=2)                        # (Bb, C)
    max_p = jnp.max(x, axis=2)                         # (Bb, C)
    pooled = jnp.concatenate([avg_p, max_p], axis=0)   # (2Bb, C)
    h = jnp.maximum(
        jnp.dot(pooled, w1t, preferred_element_type=jnp.float32), 0.0)  # (2Bb, Cr)
    mlp = jnp.dot(h, w2t, preferred_element_type=jnp.float32)           # (2Bb, C)
    ca = jax.nn.sigmoid(mlp[:bb] + mlp[bb:])           # (Bb, C)
    x1 = x * ca[:, :, None]                            # broadcast over L

    # ---------------- Spatial attention ----------------
    # Zero-padded 7-tap Conv1d(2->1) as one matmul with a constant Toeplitz
    # weight: cat(Bb, 2L) @ toep(2L, L) -> (Bb, L).
    avg_c = jnp.mean(x1, axis=1)                       # (Bb, L)
    max_c = jnp.max(x1, axis=1)                        # (Bb, L)
    cat = jnp.concatenate([avg_c, max_c], axis=1)      # (Bb, 2L)
    conv = jnp.dot(cat, toep, preferred_element_type=jnp.float32)       # (Bb, L)
    sa = jax.nn.sigmoid(conv)
    o_ref[...] = (x1 * sa[:, None, :]).astype(o_ref.dtype)


def _build_toeplitz(wsp, L, ksize):
    """(2L, L) weight T so that cat(Bb, 2L) @ T == zero-padded Conv1d(2->1, k).

    T[i, j]     = wsp[0, i - j + pad]  (avg rows)  where the tap index is valid
    T[L + i, j] = wsp[1, i - j + pad]  (max rows)  else 0.
    """
    pad = (ksize - 1) // 2
    i = jnp.arange(L)[:, None]
    j = jnp.arange(L)[None, :]
    k = i - j + pad
    valid = (k >= 0) & (k < ksize)
    kc = jnp.clip(k, 0, ksize - 1)
    t_avg = jnp.where(valid, wsp[0][kc], 0.0)
    t_max = jnp.where(valid, wsp[1][kc], 0.0)
    return jnp.concatenate([t_avg, t_max], axis=0).astype(jnp.float32)


def cbam_pallas(x, w1, w2, wsp, *, ksize=7, block_b=None):
    B, C, L = x.shape
    Cr = w1.shape[0]

    # --- choose the batch block size (amortize grid-step overhead) ---
    bytes_per_b = C * L * x.dtype.itemsize
    if block_b is None:
        # ~2 MiB input blocks: with the output and double buffering plus f32
        # temporaries this stays well under the scoped-VMEM limit on every
        # generation while still amortizing the ~0.35 us/step overhead.
        block_b = max(1, (2 * 1024 * 1024) // max(bytes_per_b, 1))
    if B >= 2:
        # keep >= 2 grid steps so the "parallel" axis can shard across cores.
        block_b = min(block_b, pl.cdiv(B, 2))
    block_b = max(1, min(block_b, B))

    nb = pl.cdiv(B, block_b)
    Bpad = nb * block_b
    if Bpad != B:
        x = jnp.pad(x, ((0, Bpad - B), (0, 0), (0, 0)))

    w1t = jnp.asarray(w1, jnp.float32).T                     # (C, Cr)
    w2t = jnp.asarray(w2, jnp.float32).T                     # (Cr, C)
    toep = _build_toeplitz(jnp.asarray(wsp, jnp.float32), L, ksize)  # (2L, L)

    out = pl.pallas_call(
        _cbam_kernel,
        out_shape=jax.ShapeDtypeStruct((Bpad, C, L), x.dtype),
        grid_spec=pl.GridSpec(
            grid=(nb,),
            in_specs=[
                pl.BlockSpec((block_b, C, L), lambda b: (b, 0, 0)),
                pl.BlockSpec((C, Cr), lambda b: (0, 0)),
                pl.BlockSpec((Cr, C), lambda b: (0, 0)),
                pl.BlockSpec((2 * L, L), lambda b: (0, 0)),
            ],
            out_specs=pl.BlockSpec((block_b, C, L), lambda b: (b, 0, 0)),
        ),
        compiler_params=pltpu.CompilerParams(
            dimension_semantics=("parallel",),
            vmem_limit_bytes=32 * 1024 * 1024,
        ),
    )(x, w1t, w2t, toep)
    return out[:B] if Bpad != B else out


def cbam_reference(x, w1, w2, wsp, *, ksize=7):
    # Pure-JAX reference mirroring the PyTorch forward.
    avg_p = jnp.mean(x, axis=2, keepdims=True)
    max_p = jnp.max(x, axis=2, keepdims=True)

    def mlp(p):
        h = jnp.maximum(jnp.einsum('rc,bco->bro', w1, p), 0.0)
        return jnp.einsum('cr,bro->bco', w2, h)

    ca = jax.nn.sigmoid(mlp(avg_p) + mlp(max_p))
    x1 = x * ca

    avg_c = jnp.mean(x1, axis=1, keepdims=True)
    max_c = jnp.max(x1, axis=1, keepdims=True)
    cat = jnp.concatenate([avg_c, max_c], axis=1)   # (B, 2, L)
    pad = (ksize - 1) // 2
    catp = jnp.pad(cat, ((0, 0), (0, 0), (pad, pad)))
    L = x.shape[2]
    out = jnp.zeros((x.shape[0], 1, L), x.dtype)
    for k in range(ksize):
        out = out + (wsp[0, k] * catp[:, 0:1, k:k + L]
                     + wsp[1, k] * catp[:, 1:2, k:k + L])
    sa = jax.nn.sigmoid(out)
    return x1 * sa


if __name__ == "__main__":
    B, C, L = 8, 32, 128
    reduction = 16
    ksize = 7
    Cr = C // reduction

    key = jax.random.PRNGKey(0)
    kx, k1, k2, k3 = jax.random.split(key, 4)
    x = jax.random.normal(kx, (B, C, L), dtype=jnp.float32)
    w1 = jax.random.normal(k1, (Cr, C), dtype=jnp.float32) * 0.1
    w2 = jax.random.normal(k2, (C, Cr), dtype=jnp.float32) * 0.1
    wsp = jax.random.normal(k3, (2, ksize), dtype=jnp.float32) * 0.1

    out = cbam_pallas(x, w1, w2, wsp, ksize=ksize)
    out = jax.block_until_ready(out)

    ref = cbam_reference(x, w1, w2, wsp, ksize=ksize)
    assert out.shape == (B, C, L)
    assert jnp.allclose(out, ref, atol=1e-4, rtol=1e-4), "mismatch vs reference"

    print("KERNEL_OK")
</pallas_src>

<mosaic_0001>
module attributes {stable_mosaic.version = 11 : i64} {
  func.func @_cbam_kernel(%arg0: i32, %arg1: memref<4x32x128xf32, #tpu.memory_space<vmem>>, %arg2: memref<32x2xf32, #tpu.memory_space<vmem>>, %arg3: memref<2x32xf32, #tpu.memory_space<vmem>>, %arg4: memref<256x128xf32, #tpu.memory_space<vmem>>, %arg5: memref<4x32x128xf32, #tpu.memory_space<vmem>>) attributes {dimension_semantics = [#tpu.dimension_semantics<parallel>], iteration_bounds = array<i64: 2>, scalar_prefetch = 0 : i64, scratch_operands = 0 : i64, tpu.core_type = #tpu.core_type<tc>, window_params = [{transform_indices = @transform_0, window_bounds = array<i64: 4, 32, 128>}, {pipeline_mode = #tpu.pipeline_mode<synchronous>, transform_indices = @transform_1, window_bounds = array<i64: 32, 2>}, {pipeline_mode = #tpu.pipeline_mode<synchronous>, transform_indices = @transform_2, window_bounds = array<i64: 2, 32>}, {pipeline_mode = #tpu.pipeline_mode<synchronous>, transform_indices = @transform_3, window_bounds = array<i64: 256, 128>}, {transform_indices = @transform_4, window_bounds = array<i64: 4, 32, 128>}]} {
    %c0 = arith.constant 0 : index
    %c0_0 = arith.constant 0 : index
    %c0_1 = arith.constant 0 : index
    %0 = vector.load %arg1[%c0, %c0_0, %c0_1] : memref<4x32x128xf32, #tpu.memory_space<vmem>>, vector<4x32x128xf32>
    %c0_2 = arith.constant 0 : index
    %c0_3 = arith.constant 0 : index
    %1 = vector.load %arg2[%c0_2, %c0_3] : memref<32x2xf32, #tpu.memory_space<vmem>>, vector<32x2xf32>
    %c0_4 = arith.constant 0 : index
    %c0_5 = arith.constant 0 : index
    %2 = vector.load %arg3[%c0_4, %c0_5] : memref<2x32xf32, #tpu.memory_space<vmem>>, vector<2x32xf32>
    %c0_6 = arith.constant 0 : index
    %c0_7 = arith.constant 0 : index
    %3 = vector.load %arg4[%c0_6, %c0_7] : memref<256x128xf32, #tpu.memory_space<vmem>>, vector<256x128xf32>
    %cst = arith.constant dense<0.000000e+00> : vector<4x32xf32>
    %4 = vector.multi_reduction <add>, %0, %cst [2] : vector<4x32x128xf32> to vector<4x32xf32>
    %cst_8 = arith.constant 1.280000e+02 : f32
    %5 = vector.broadcast %cst_8 : f32 to vector<4x32xf32>
    %6 = arith.divf %4, %5 : vector<4x32xf32>
    %cst_9 = arith.constant dense<0xFF800000> : vector<4x32xf32>
    %7 = vector.multi_reduction <maximumf>, %0, %cst_9 [2] : vector<4x32x128xf32> to vector<4x32xf32>
    %8 = tpu.concatenate %6, %7 in 0 : vector<4x32xf32>, vector<4x32xf32> -> vector<8x32xf32>
    %cst_10 = arith.constant dense<0.000000e+00> : vector<8x2xf32>
    %9 = tpu.matmul %8, %1, %cst_10 {dimension_numbers = #tpu.dot_dimension_numbers<[1], [0], [0], [1], [0, 0, 1, 1], [], []>} : vector<8x32xf32>, vector<32x2xf32>, vector<8x2xf32> -> vector<8x2xf32>
    %cst_11 = arith.constant 0.000000e+00 : f32
    %10 = vector.broadcast %cst_11 : f32 to vector<8x2xf32>
    %11 = arith.maximumf %9, %10 : vector<8x2xf32>
    %cst_12 = arith.constant dense<0.000000e+00> : vector<8x32xf32>
    %12 = tpu.matmul %11, %2, %cst_12 {dimension_numbers = #tpu.dot_dimension_numbers<[1], [0], [0], [1], [0, 0, 1, 1], [], []>} : vector<8x2xf32>, vector<2x32xf32>, vector<8x32xf32> -> vector<8x32xf32>
    %13 = vector.extract_strided_slice %12 {offsets = [0, 0], sizes = [4, 32], strides = [1, 1]} : vector<8x32xf32> to vector<4x32xf32>
    %14 = vector.extract_strided_slice %12 {offsets = [4, 0], sizes = [4, 32], strides = [1, 1]} : vector<8x32xf32> to vector<4x32xf32>
    %15 = arith.addf %13, %14 : vector<4x32xf32>
    %16 = arith.negf %15 : vector<4x32xf32>
    %17 = math.exp %16 : vector<4x32xf32>
    %cst_13 = arith.constant 1.000000e+00 : f32
    %18 = vector.broadcast %cst_13 : f32 to vector<4x32xf32>
    %19 = arith.addf %18, %17 : vector<4x32xf32>
    %20 = arith.divf %18, %19 : vector<4x32xf32>
    %21 = vector.shape_cast %20 : vector<4x32xf32> to vector<4x32x1xf32>
    %22 = vector.broadcast %21 : vector<4x32x1xf32> to vector<4x32x128xf32>
    %23 = arith.mulf %0, %22 : vector<4x32x128xf32>
    %cst_14 = arith.constant dense<0.000000e+00> : vector<4x128xf32>
    %24 = vector.multi_reduction <add>, %23, %cst_14 [1] : vector<4x32x128xf32> to vector<4x128xf32>
    %cst_15 = arith.constant 3.200000e+01 : f32
    %25 = vector.broadcast %cst_15 : f32 to vector<4x128xf32>
    %26 = arith.divf %24, %25 : vector<4x128xf32>
    %cst_16 = arith.constant dense<0xFF800000> : vector<4x128xf32>
    %27 = vector.multi_reduction <maximumf>, %23, %cst_16 [1] : vector<4x32x128xf32> to vector<4x128xf32>
    %28 = tpu.concatenate %26, %27 in 1 : vector<4x128xf32>, vector<4x128xf32> -> vector<4x256xf32>
    %cst_17 = arith.constant dense<0.000000e+00> : vector<4x128xf32>
    %29 = tpu.matmul %28, %3, %cst_17 {dimension_numbers = #tpu.dot_dimension_numbers<[1], [0], [0], [1], [0, 0, 1, 1], [], []>} : vector<4x256xf32>, vector<256x128xf32>, vector<4x128xf32> -> vector<4x128xf32>
    %30 = arith.negf %29 : vector<4x128xf32>
    %31 = math.exp %30 : vector<4x128xf32>
    %cst_18 = arith.constant 1.000000e+00 : f32
    %32 = vector.broadcast %cst_18 : f32 to vector<4x128xf32>
    %33 = arith.addf %32, %31 : vector<4x128xf32>
    %34 = arith.divf %32, %33 : vector<4x128xf32>
    %35 = vector.shape_cast %34 : vector<4x128xf32> to vector<4x1x128xf32>
    %36 = vector.broadcast %35 : vector<4x1x128xf32> to vector<4x32x128xf32>
    %37 = arith.mulf %23, %36 : vector<4x32x128xf32>
    %c0_19 = arith.constant 0 : index
    %c0_20 = arith.constant 0 : index
    %c0_21 = arith.constant 0 : index
    %38 = vector.load %arg5[%c0_19, %c0_20, %c0_21] : memref<4x32x128xf32, #tpu.memory_space<vmem>>, vector<4x32x128xf32>
    tpu.vector_store %arg5[%c0_19, %c0_20, %c0_21], %37 {strides = array<i32>} : memref<4x32x128xf32, #tpu.memory_space<vmem>>, vector<4x32x128xf32>,
    return
  }
  func.func @transform_0(%arg0: i32) -> (i32, i32, i32) {
    %c0_i32 = arith.constant 0 : i32
    %c0_i32_0 = arith.constant 0 : i32
    %c0_i32_1 = arith.constant 0 : i32
    return %arg0, %c0_i32, %c0_i32_0 : i32, i32, i32
  }
  func.func @transform_1(%arg0: i32) -> (i32, i32) {
    %c0_i32 = arith.constant 0 : i32
    %c0_i32_0 = arith.constant 0 : i32
    %c0_i32_1 = arith.constant 0 : i32
    return %c0_i32, %c0_i32_0 : i32, i32
  }
  func.func @transform_2(%arg0: i32) -> (i32, i32) {
    %c0_i32 = arith.constant 0 : i32
    %c0_i32_0 = arith.constant 0 : i32
    %c0_i32_1 = arith.constant 0 : i32
    return %c0_i32, %c0_i32_0 : i32, i32
  }
  func.func @transform_3(%arg0: i32) -> (i32, i32) {
    %c0_i32 = arith.constant 0 : i32
    %c0_i32_0 = arith.constant 0 : i32
    %c0_i32_1 = arith.constant 0 : i32
    return %c0_i32, %c0_i32_0 : i32, i32
  }
  func.func @transform_4(%arg0: i32) -> (i32, i32, i32) {
    %c0_i32 = arith.constant 0 : i32
    %c0_i32_0 = arith.constant 0 : i32
    %c0_i32_1 = arith.constant 0 : i32
    return %arg0, %c0_i32, %c0_i32_0 : i32, i32, i32
  }
}

</mosaic_0001>

<llo_original>
// kernel: tpu_custom_call.1
$region0: #{tpu_custom_call.1}
  #allocation0 [shape = 'u32[]', space=smem, size = 0x4, offset = 0x4, fixed_abs, tag = 'smem constant byte address 0x4 - core index']
  #allocation1 [shape = 'u32[144,128]{1,0:T(1,128)}', space=vmem, size = 0x12000, scoped, tag = 'internal scratch']
  %s0 = inlined_call_operand.hbm [shape: f32[8,32,128], index: 0, kind: input, shape index: {}]
  %s1 = inlined_call_operand.vmem [shape: f32[32,2], index: 1, kind: input, shape index: {}]
  %s2 = inlined_call_operand.vmem [shape: f32[2,32], index: 2, kind: input, shape index: {}]
  %s3 = inlined_call_operand.hbm [shape: f32[256,128], index: 3, kind: input, shape index: {}]
  %s4 = inlined_call_operand.hbm [shape: f32[8,32,128], index: 4, kind: output, shape index: {}]
  %s5 = sld [smem:[#allocation0]]
  $region57: #{tpu_custom_call.1} parent=0
    _
  %s7 = ssub.s32 1, %s5
  %s8 = scalar_select 0, %s7, %s5
  $region1: #{tpu_custom_call.1} parent=0
    #allocation2 [shape = 'u8[131072]{0}', space=vmem, size = 0x20000, scoped, tag = 'input window, operand 0']
    #allocation3 [shape = 's32[2]{0}', space=sflag, size = 0x8, scoped, tag = 'scoped memory for tpu_custom_call.1']
    #allocation4 [shape = 's32[2]{0}', space=sflag, size = 0x8, scoped, tag = 'scoped memory for tpu_custom_call.1']
    #allocation5 [shape = 'u8[131072]{0}', space=vmem, size = 0x20000, scoped, tag = 'input window, operand 3, single buffered']
    #allocation6 [shape = 's32[1]{0}', space=sflag, size = 0x4, scoped, tag = 'scoped memory for tpu_custom_call.1']
    #allocation7 [shape = 'u8[131072]{0}', space=vmem, size = 0x20000, scoped, tag = 'output window, operand 0']
    %9 = vsyncpa [#allocation3], 0
    %s10 = scalar_lea.sflag [#allocation3], 1
    %11 = vsyncpa %s10, 0
    %12 = vsyncpa [#allocation6], 0
    %13 = vsyncpa [#allocation4], 0
    %s14 = scalar_lea.sflag [#allocation4], 1
    %15 = vsyncpa %s14, 0
    loop: start=0, step=1, limit=4
    $region2: #{tpu_custom_call.1} parent=1 // loop_pre_header
      _
    $region3: #{tpu_custom_call.1} parent=1 // loop_header
      %s17 = sphi 0, %s21
      %p18 = scmp.ge.s32.totalorder %s17, 4
      %s27 = sphi 0, %s29
      %s30 = sphi 0, %s27
      %s31 = sphi 0, %s30
      %s47 = sphi 0, %s31
      %s51 = sphi 0, %s51
      %s53 = sphi 0, %s51
      %s54 = sphi 0, %s53
      %s68 = sphi 0, %s54
      %s72 = sphi 0, %s72
      %s74 = sphi 0, %s72
      %s75 = sphi 0, %s74
      %s89 = sphi 0, %s75
      %s93 = sphi 0, %s93
      %s95 = sphi 0, %s93
      %s96 = sphi 0, %s95
      %s110 = sphi 0, %s96
      %s116 = sphi 0, %s118
      %s119 = sphi 0, %s116
      %s120 = sphi 0, %s119
      %s136 = sphi 0, %s120
    $region4: #{tpu_custom_call.1} parent=1 // loop_header_branch
      %20 = sbr.rel (%p18) target = $region8
    $region5: #{tpu_custom_call.1} parent=1 // loop_body
      %s22 = ssub.s32 %s17, 1
      %s23 = ssub.s32 %s17, 2
      %s24 = sadd.s32 %s17, 1
      %s25 = ssub.s32 %s17, %s24
      %p26 = scmp.eq.s32.totalorder %s25, 0
      %s28 = sadd.s32 %s27, 1
      %s29 = scalar_select %p26, %s27, %s28
      %p32 = pneg %p26
      %p33 = scmp.eq.s32.totalorder %s17, 1
      %p34 = por %p32, %p33
      %p35 = scmp.ne.s32.totalorder %s27, %s30
      %p36 = scmp.eq.s32.totalorder %s17, 0
      %p37 = por %p35, %p36
      %p38 = scmp.ne.s32.totalorder %s27, %s30
      %p39 = scmp.eq.s32.totalorder %s22, 1
      %p40 = por %p38, %p39
      %p41 = scmp.ne.s32.totalorder %s30, %s31
      %p42 = scmp.eq.s32.totalorder %s22, 0
      %p43 = por %p41, %p42
      %p44 = scmp.ne.s32.totalorder %s30, %s31
      %p45 = scmp.eq.s32.totalorder %s23, 1
      %p46 = por %p44, %p45
      %p48 = scmp.ne.s32.totalorder %s31, %s47
      %p49 = scmp.eq.s32.totalorder %s23, 0
      %p50 = por %p48, %p49
      %s52 = sadd.s32 %s51, 1
      %p55 = scmp.eq.s32.totalorder %s17, 1
      %p56 = scmp.ne.s32.totalorder %s51, %s53
      %p57 = scmp.eq.s32.totalorder %s17, 0
      %p58 = por %p56, %p57
      %p59 = scmp.ne.s32.totalorder %s51, %s53
      %p60 = scmp.eq.s32.totalorder %s22, 1
      %p61 = por %p59, %p60
      %p62 = scmp.ne.s32.totalorder %s53, %s54
      %p63 = scmp.eq.s32.totalorder %s22, 0
      %p64 = por %p62, %p63
      %p65 = scmp.ne.s32.totalorder %s53, %s54
      %p66 = scmp.eq.s32.totalorder %s23, 1
      %p67 = por %p65, %p66
      %p69 = scmp.ne.s32.totalorder %s54, %s68
      %p70 = scmp.eq.s32.totalorder %s23, 0
      %p71 = por %p69, %p70
      %s73 = sadd.s32 %s72, 1
      %p76 = scmp.eq.s32.totalorder %s17, 1
      %p77 = scmp.ne.s32.totalorder %s72, %s74
      %p78 = scmp.eq.s32.totalorder %s17, 0
      %p79 = por %p77, %p78
      %p80 = scmp.ne.s32.totalorder %s72, %s74
      %p81 = scmp.eq.s32.totalorder %s22, 1
      %p82 = por %p80, %p81
      %p83 = scmp.ne.s32.totalorder %s74, %s75
      %p84 = scmp.eq.s32.totalorder %s22, 0
      %p85 = por %p83, %p84
      %p86 = scmp.ne.s32.totalorder %s74, %s75
      %p87 = scmp.eq.s32.totalorder %s23, 1
      %p88 = por %p86, %p87
      %p90 = scmp.ne.s32.totalorder %s75, %s89
      %p91 = scmp.eq.s32.totalorder %s23, 0
      %p92 = por %p90, %p91
      %s94 = sadd.s32 %s93, 1
      %p97 = scmp.eq.s32.totalorder %s17, 1
      %p98 = scmp.ne.s32.totalorder %s93, %s95
      %p99 = scmp.eq.s32.totalorder %s17, 0
      %p100 = por %p98, %p99
      %p101 = scmp.ne.s32.totalorder %s93, %s95
      %p102 = scmp.eq.s32.totalorder %s22, 1
      %p103 = por %p101, %p102
      %p104 = scmp.ne.s32.totalorder %s95, %s96
      %p105 = scmp.eq.s32.totalorder %s22, 0
      %p106 = por %p104, %p105
      %p107 = scmp.ne.s32.totalorder %s95, %s96
      %p108 = scmp.eq.s32.totalorder %s23, 1
      %p109 = por %p107, %p108
      %p111 = scmp.ne.s32.totalorder %s96, %s110
      %p112 = scmp.eq.s32.totalorder %s23, 0
      %p113 = por %p111, %p112
      %s114 = ssub.s32 %s17, %s24
      %p115 = scmp.eq.s32.totalorder %s114, 0
      %s117 = sadd.s32 %s116, 1
      %s118 = scalar_select %p115, %s116, %s117
      %p121 = pneg %p115
      %p122 = scmp.eq.s32.totalorder %s17, 1
      %p123 = por %p121, %p122
      %p124 = scmp.ne.s32.totalorder %s116, %s119
      %p125 = scmp.eq.s32.totalorder %s17, 0
      %p126 = por %p124, %p125
      %p127 = scmp.ne.s32.totalorder %s116, %s119
      %p128 = scmp.eq.s32.totalorder %s22, 1
      %p129 = por %p127, %p128
      %p130 = scmp.ne.s32.totalorder %s119, %s120
      %p131 = scmp.eq.s32.totalorder %s22, 0
      %p132 = por %p130, %p131
      %p133 = scmp.ne.s32.totalorder %s119, %s120
      %p134 = scmp.eq.s32.totalorder %s23, 1
      %p135 = por %p133, %p134
      %p137 = scmp.ne.s32.totalorder %s120, %s136
      %p138 = scmp.eq.s32.totalorder %s23, 0
      %p139 = por %p137, %p138
      %p140 = scmp.le.s32.totalorder 1, %s17
      %p141 = scmp.lt.s32.totalorder %s17, 3
      %p142 = pnand %p140, %p141
      %p143 = pneg %p142
      // Predicated region
      $region9: #{tpu_custom_call.1} parent=5 // pred_check
        _
      $region10: #{tpu_custom_call.1} parent=5 // pred_check_branch
        %145 = sbr.rel (%p142) target = $region12
      $region11: #{tpu_custom_call.1} parent=5 // pred_region
        %s146 = ssub.s32 %s17, 1
        // Predicated region
        $region13: #{tpu_custom_call.1} parent=11 // pred_check
          %p147 = pneg %p64
        $region14: #{tpu_custom_call.1} parent=11 // pred_check_branch
          %149 = sbr.rel (%p147) target = $region16
        $region15: #{tpu_custom_call.1} parent=11 // pred_region
          _
        $region16: #{tpu_custom_call.1} parent=11 // pred_fallthru
          _
        // Predicated region
        $region17: #{tpu_custom_call.1} parent=11 // pred_check
          %p150 = pneg %p85
        $region18: #{tpu_custom_call.1} parent=11 // pred_check_branch
          %152 = sbr.rel (%p150) target = $region20
        $region19: #{tpu_custom_call.1} parent=11 // pred_region
          _
        $region20: #{tpu_custom_call.1} parent=11 // pred_fallthru
          _
        // Predicated region
        $region21: #{tpu_custom_call.1} parent=11 // pred_check
          %p153 = pneg %p106
        $region22: #{tpu_custom_call.1} parent=11 // pred_check_branch
          %155 = sbr.rel (%p153) target = $region24
        $region23: #{tpu_custom_call.1} parent=11 // pred_region
          %s157 = ssub.s32 4096, 4096
          %158 = vsyncadd [#allocation6], %s157
          %s159 = sshll.u32 [#allocation5], 4
          %s160 = int_to_ptr.vmem [resolvable:$true] %s159
          %165 = dma.hbm_to_vmem [thread:$0]  %s3, 4096, %s160, [#allocation6], 128, 128, 8
        $region24: #{tpu_custom_call.1} parent=11 // pred_fallthru
          _
      $region12: #{tpu_custom_call.1} parent=5 // pred_fallthru
        _
      %p166 = scmp.lt.s32.totalorder %s17, 2
      // Predicated region
      $region25: #{tpu_custom_call.1} parent=5 // pred_check
        %p167 = pneg %p166
      $region26: #{tpu_custom_call.1} parent=5 // pred_check_branch
        %169 = sbr.rel (%p167) target = $region28
      $region27: #{tpu_custom_call.1} parent=5 // pred_region
        // Predicated region
        $region29: #{tpu_custom_call.1} parent=27 // pred_check
          %p170 = pneg %p37
        $region30: #{tpu_custom_call.1} parent=27 // pred_check_branch
          %172 = sbr.rel (%p170) target = $region32
        $region31: #{tpu_custom_call.1} parent=27 // pred_region
          %s173 = sand.u32 %s27, 1
          %s174 = scalar_lea.sflag [#allocation3], %s173
          %s175 = sand.u32 %s27, 1
          %s176 = smul.addr %s175, 128
          %s177 = scalar_lea.vmem [#allocation2], %s176
          %s178 = smul.u32 4, %s17
          %s180 = ssub.s32 2048, 2048
          %181 = vsyncadd %s174, %s180
          %s182 = smul.addr %s178, 4
          %s183 = smul.addr %s182, 128
          %s184 = scalar_lea.hbm %s0, %s183
          %s185 = sshll.u32 %s177, 4
          %s186 = int_to_ptr.vmem [resolvable:$true] %s185
          %191 = dma.hbm_to_vmem [thread:$0]  %s184, 2048, %s186, %s174, 128, 128, 8
        $region32: #{tpu_custom_call.1} parent=27 // pred_fallthru
          _
      $region28: #{tpu_custom_call.1} parent=5 // pred_fallthru
        _
      %p192 = scmp.le.s32.totalorder 1, %s17
      %p193 = scmp.lt.s32.totalorder %s17, 3
      %p194 = pnand %p192, %p193
      %p195 = pneg %p194
      // Predicated region
      $region33: #{tpu_custom_call.1} parent=5 // pred_check
        _
      $region34: #{tpu_custom_call.1} parent=5 // pred_check_branch
        %197 = sbr.rel (%p194) target = $region36
      $region35: #{tpu_custom_call.1} parent=5 // pred_region
        %s198 = ssub.s32 %s17, 1
        %s199 = sand.u32 %s30, 1
        %s200 = scalar_lea.sflag [#allocation3], %s199
        %s201 = sand.u32 %s30, 1
        %s202 = smul.addr %s201, 128
        %s203 = scalar_lea.vmem [#allocation2], %s202
        // Predicated region
        $region37: #{tpu_custom_call.1} parent=35 // pred_check
          %p204 = pneg %p43
        $region38: #{tpu_custom_call.1} parent=35 // pred_check_branch
          %206 = sbr.rel (%p204) target = $region40
        $region39: #{tpu_custom_call.1} parent=35 // pred_region
          %207 = dma.done %s200, 2048
        $region40: #{tpu_custom_call.1} parent=35 // pred_fallthru
          _
        // Predicated region
        $region41: #{tpu_custom_call.1} parent=35 // pred_check
          %p208 = pneg %p106
        $region42: #{tpu_custom_call.1} parent=35 // pred_check_branch
          %210 = sbr.rel (%p208) target = $region44
        $region43: #{tpu_custom_call.1} parent=35 // pred_region
          %211 = dma.done [#allocation6], 4096
        $region44: #{tpu_custom_call.1} parent=35 // pred_fallthru
          _
        %s212 = sand.u32 %s30, 1
        %s213 = scalar_lea.sflag [#allocation3], %s212
        %s214 = sand.u32 %s30, 1
        %s215 = smul.addr %s214, 128
        %s216 = scalar_lea.vmem [#allocation2], %s215
        %p217 = pneg %p43
        %p218 = pneg %p40
        %p219 = pneg %p64
        %p220 = pneg %p61
        %p221 = pneg %p85
        %p222 = pneg %p82
        %p223 = pneg %p106
        %p224 = pneg %p103
        %p225 = pneg %p132
        %p226 = pneg %p129
        %s227 = sand.u32 %s119, 1
        %s228 = scalar_lea.sflag [#allocation4], %s227
        %s229 = sand.u32 %s119, 1
        %s230 = smul.addr %s229, 128
        %s231 = scalar_lea.vmem [#allocation7], %s230
        %s232 = smul.u32 4, %s22
        %s233 = smul.u32 4, %s22
        %v234 = vld [vmem:[%s203] sm:$0xff]
        %v235 = vld [vmem:[%s203 + $0x8] sm:$0xff]
        %v236 = vld [vmem:[%s203 + $0x10] sm:$0xff]
        %v237 = vld [vmem:[%s203 + $0x18] sm:$0xff]
        %v238 = vld [vmem:[%s203 + $0x20] sm:$0xff]
        %v239 = vld [vmem:[%s203 + $0x28] sm:$0xff]
        %v240 = vld [vmem:[%s203 + $0x30] sm:$0xff]
        %v241 = vld [vmem:[%s203 + $0x38] sm:$0xff]
        %v242 = vld [vmem:[%s203 + $0x40] sm:$0xff]
        %v243 = vld [vmem:[%s203 + $0x48] sm:$0xff]
        %v244 = vld [vmem:[%s203 + $0x50] sm:$0xff]
        %v245 = vld [vmem:[%s203 + $0x58] sm:$0xff]
        %v246 = vld [vmem:[%s203 + $0x60] sm:$0xff]
        %v247 = vld [vmem:[%s203 + $0x68] sm:$0xff]
        %v248 = vld [vmem:[%s203 + $0x70] sm:$0xff]
        %v249 = vld [vmem:[%s203 + $0x78] sm:$0xff]
        %v250 = vld [vmem:[%s1] sm:$0xff]
        %v251 = vld [vmem:[%s1 + $0x8] sm:$0xff]
        %v252 = vld [vmem:[%s1 + $0x10] sm:$0xff]
        %v253 = vld [vmem:[%s1 + $0x18] sm:$0xff]
        %v254 = vld [vmem:[%s2] sm:$0x3]
        %v255 = vld [vmem:[#allocation5] sm:$0xff]
        %v256 = vld [vmem:[#allocation5 + $0x8] sm:$0xff]
        %v257 = vld [vmem:[#allocation5 + $0x10] sm:$0xff]
        %v258 = vld [vmem:[#allocation5 + $0x18] sm:$0xff]
        %v259 = vld [vmem:[#allocation5 + $0x20] sm:$0xff]
        %v260 = vld [vmem:[#allocation5 + $0x28] sm:$0xff]
        %v261 = vld [vmem:[#allocation5 + $0x30] sm:$0xff]
        %v262 = vld [vmem:[#allocation5 + $0x38] sm:$0xff]
        %v263 = vld [vmem:[#allocation5 + $0x40] sm:$0xff]
        %v264 = vld [vmem:[#allocation5 + $0x48] sm:$0xff]
        %v265 = vld [vmem:[#allocation5 + $0x50] sm:$0xff]
        %v266 = vld [vmem:[#allocation5 + $0x58] sm:$0xff]
        %v267 = vld [vmem:[#allocation5 + $0x60] sm:$0xff]
        %v268 = vld [vmem:[#allocation5 + $0x68] sm:$0xff]
        %v269 = vld [vmem:[#allocation5 + $0x70] sm:$0xff]
        %v270 = vld [vmem:[#allocation5 + $0x78] sm:$0xff]
        %v271 = vld [vmem:[#allocation5 + $0x80] sm:$0xff]
        %v272 = vld [vmem:[#allocation5 + $0x88] sm:$0xff]
        %v273 = vld [vmem:[#allocation5 + $0x90] sm:$0xff]
        %v274 = vld [vmem:[#allocation5 + $0x98] sm:$0xff]
        %v275 = vld [vmem:[#allocation5 + $0xa0] sm:$0xff]
        %v276 = vld [vmem:[#allocation5 + $0xa8] sm:$0xff]
        %v277 = vld [vmem:[#allocation5 + $0xb0] sm:$0xff]
        %v278 = vld [vmem:[#allocation5 + $0xb8] sm:$0xff]
        %v279 = vld [vmem:[#allocation5 + $0xc0] sm:$0xff]
        %v280 = vld [vmem:[#allocation5 + $0xc8] sm:$0xff]
        %v281 = vld [vmem:[#allocation5 + $0xd0] sm:$0xff]
        %v282 = vld [vmem:[#allocation5 + $0xd8] sm:$0xff]
        %v283 = vld [vmem:[#allocation5 + $0xe0] sm:$0xff]
        %v284 = vld [vmem:[#allocation5 + $0xe8] sm:$0xff]
        %v285 = vld [vmem:[#allocation5 + $0xf0] sm:$0xff]
        %v286 = vld [vmem:[#allocation5 + $0xf8] sm:$0xff]
        %287 = vadd.xlane.f32.xlu0 %v234
        %v288 = vpop.xlane.xlu0 %287
        %289 = vadd.xlane.f32.xlu0 %v235
        %v290 = vpop.xlane.xlu0 %289
        %291 = vadd.xlane.f32.xlu0 %v236
        %v292 = vpop.xlane.xlu0 %291
        %293 = vadd.xlane.f32.xlu0 %v237
        %v294 = vpop.xlane.xlu0 %293
        %295 = vadd.xlane.f32.xlu0 %v238
        %v296 = vpop.xlane.xlu0 %295
        %297 = vadd.xlane.f32.xlu0 %v239
        %v298 = vpop.xlane.xlu0 %297
        %299 = vadd.xlane.f32.xlu0 %v240
        %v300 = vpop.xlane.xlu0 %299
        %301 = vadd.xlane.f32.xlu0 %v241
        %v302 = vpop.xlane.xlu0 %301
        %303 = vadd.xlane.f32.xlu0 %v242
        %v304 = vpop.xlane.xlu0 %303
        %305 = vadd.xlane.f32.xlu0 %v243
        %v306 = vpop.xlane.xlu0 %305
        %307 = vadd.xlane.f32.xlu0 %v244
        %v308 = vpop.xlane.xlu0 %307
        %309 = vadd.xlane.f32.xlu0 %v245
        %v310 = vpop.xlane.xlu0 %309
        %311 = vadd.xlane.f32.xlu0 %v246
        %v312 = vpop.xlane.xlu0 %311
        %313 = vadd.xlane.f32.xlu0 %v247
        %v314 = vpop.xlane.xlu0 %313
        %315 = vadd.xlane.f32.xlu0 %v248
        %v316 = vpop.xlane.xlu0 %315
        %317 = vadd.xlane.f32.xlu0 %v249
        %v318 = vpop.xlane.xlu0 %317
        %v319 = vrcp.pop 128.0
        %v320 = vmul.f32 %v288, %v319
        %v321 = vmul.f32 %v290, %v319
        %v322 = vmul.f32 %v292, %v319
        %v323 = vmul.f32 %v294, %v319
        %v324 = vmul.f32 %v296, %v319
        %v325 = vmul.f32 %v298, %v319
        %v326 = vmul.f32 %v300, %v319
        %v327 = vmul.f32 %v302, %v319
        %v328 = vmul.f32 %v304, %v319
        %v329 = vmul.f32 %v306, %v319
        %v330 = vmul.f32 %v308, %v319
        %v331 = vmul.f32 %v310, %v319
        %v332 = vmul.f32 %v312, %v319
        %v333 = vmul.f32 %v314, %v319
        %v334 = vmul.f32 %v316, %v319
        %v335 = vmul.f32 %v318, %v319
        %336 = vmax.xlane.f32.xlu0 %v234
        %v337 = vpop.xlane.xlu0 %336
        %338 = vmax.xlane.f32.xlu0 %v235
        %v339 = vpop.xlane.xlu0 %338
        %340 = vmax.xlane.f32.xlu0 %v236
        %v341 = vpop.xlane.xlu0 %340
        %342 = vmax.xlane.f32.xlu0 %v237
        %v343 = vpop.xlane.xlu0 %342
        %344 = vmax.xlane.f32.xlu0 %v238
        %v345 = vpop.xlane.xlu0 %344
        %346 = vmax.xlane.f32.xlu0 %v239
        %v347 = vpop.xlane.xlu0 %346
        %348 = vmax.xlane.f32.xlu0 %v240
        %v349 = vpop.xlane.xlu0 %348
        %350 = vmax.xlane.f32.xlu0 %v241
        %v351 = vpop.xlane.xlu0 %350
        %352 = vmax.xlane.f32.xlu0 %v242
        %v353 = vpop.xlane.xlu0 %352
        %354 = vmax.xlane.f32.xlu0 %v243
        %v355 = vpop.xlane.xlu0 %354
        %356 = vmax.xlane.f32.xlu0 %v244
        %v357 = vpop.xlane.xlu0 %356
        %358 = vmax.xlane.f32.xlu0 %v245
        %v359 = vpop.xlane.xlu0 %358
        %360 = vmax.xlane.f32.xlu0 %v246
        %v361 = vpop.xlane.xlu0 %360
        %362 = vmax.xlane.f32.xlu0 %v247
        %v363 = vpop.xlane.xlu0 %362
        %364 = vmax.xlane.f32.xlu0 %v248
        %v365 = vpop.xlane.xlu0 %364
        %366 = vmax.xlane.f32.xlu0 %v249
        %v367 = vpop.xlane.xlu0 %366
        %v384 = vlaneseq
        %v385 = vand.u32 %v384, 127
        %v386 = vlaneseq
        %v387 = vshrl.u32 %v386, 7
        %v388 = vsub.s32 %v385, %v387
        %v389 = vrot.slane %v320, %v388
        %v390 = vadd.s32 %v385, 4294967288
        %v391 = vlaneseq
        %v392 = vshrl.u32 %v391, 7
        %v393 = vsub.s32 %v390, %v392
        %v394 = vrot.slane %v321, %v393
        %vm395 = vcmask 130112
        %v396 = vsel %vm395, %v394, %v389
        %v397 = vadd.s32 %v385, 4294967280
        %v398 = vlaneseq
        %v399 = vshrl.u32 %v398, 7
        %v400 = vsub.s32 %v397, %v399
        %v401 = vrot.slane %v322, %v400
        %vm402 = vcmask 195712
        %v403 = vsel %vm402, %v401, %v396
        %v404 = vadd.s32 %v385, 4294967272
        %v405 = vlaneseq
        %v406 = vshrl.u32 %v405, 7
        %v407 = vsub.s32 %v404, %v406
        %v408 = vrot.slane %v323, %v407
        %vm409 = vcmask 261312
        %v410 = vsel %vm409, %v408, %v403
        %v411 = vlaneseq
        %v412 = vshrl.u32 %v411, 7
        %v413 = vsub.s32 %v385, %v412
        %v414 = vrot.slane %v324, %v413
        %v415 = vlaneseq
        %v416 = vshrl.u32 %v415, 7
        %v417 = vsub.s32 %v390, %v416
        %v418 = vrot.slane %v325, %v417
        %v419 = vsel %vm395, %v418, %v414
        %v420 = vlaneseq
        %v421 = vshrl.u32 %v420, 7
        %v422 = vsub.s32 %v397, %v421
        %v423 = vrot.slane %v326, %v422
        %v424 = vsel %vm402, %v423, %v419
        %v425 = vlaneseq
        %v426 = vshrl.u32 %v425, 7
        %v427 = vsub.s32 %v404, %v426
        %v428 = vrot.slane %v327, %v427
        %v429 = vsel %vm409, %v428, %v424
        %v430 = vlaneseq
        %v431 = vshrl.u32 %v430, 7
        %v432 = vsub.s32 %v385, %v431
        %v433 = vrot.slane %v328, %v432
        %v434 = vlaneseq
        %v435 = vshrl.u32 %v434, 7
        %v436 = vsub.s32 %v390, %v435
        %v437 = vrot.slane %v329, %v436
        %v438 = vsel %vm395, %v437, %v433
        %v439 = vlaneseq
        %v440 = vshrl.u32 %v439, 7
        %v441 = vsub.s32 %v397, %v440
        %v442 = vrot.slane %v330, %v441
        %v443 = vsel %vm402, %v442, %v438
        %v444 = vlaneseq
        %v445 = vshrl.u32 %v444, 7
        %v446 = vsub.s32 %v404, %v445
        %v447 = vrot.slane %v331, %v446
        %v448 = vsel %vm409, %v447, %v443
        %v449 = vlaneseq
        %v450 = vshrl.u32 %v449, 7
        %v451 = vsub.s32 %v385, %v450
        %v452 = vrot.slane %v332, %v451
        %v453 = vlaneseq
        %v454 = vshrl.u32 %v453, 7
        %v455 = vsub.s32 %v390, %v454
        %v456 = vrot.slane %v333, %v455
        %v457 = vsel %vm395, %v456, %v452
        %v458 = vlaneseq
        %v459 = vshrl.u32 %v458, 7
        %v460 = vsub.s32 %v397, %v459
        %v461 = vrot.slane %v334, %v460
        %v462 = vsel %vm402, %v461, %v457
        %v463 = vlaneseq
        %v464 = vshrl.u32 %v463, 7
        %v465 = vsub.s32 %v404, %v464
        %v466 = vrot.slane %v335, %v465
        %v467 = vsel %vm409, %v466, %v462
        %vm468 = vcmask 1041409
        %v469 = vsel %vm468, %v429, %v410
        %vm470 = vcmask 1042434
        %v471 = vsel %vm470, %v448, %v469
        %vm472 = vcmask 1043459
        %v473 = vsel %vm472, %v467, %v471
        %v491 = vlaneseq
        %v492 = vshrl.u32 %v491, 7
        %v493 = vsub.s32 %v385, %v492
        %v494 = vrot.slane %v337, %v493
        %v495 = vlaneseq
        %v496 = vshrl.u32 %v495, 7
        %v497 = vsub.s32 %v390, %v496
        %v498 = vrot.slane %v339, %v497
        %v499 = vsel %vm395, %v498, %v494
        %v500 = vlaneseq
        %v501 = vshrl.u32 %v500, 7
        %v502 = vsub.s32 %v397, %v501
        %v503 = vrot.slane %v341, %v502
        %v504 = vsel %vm402, %v503, %v499
        %v505 = vlaneseq
        %v506 = vshrl.u32 %v505, 7
        %v507 = vsub.s32 %v404, %v506
        %v508 = vrot.slane %v343, %v507
        %v509 = vsel %vm409, %v508, %v504
        %v510 = vlaneseq
        %v511 = vshrl.u32 %v510, 7
        %v512 = vsub.s32 %v385, %v511
        %v513 = vrot.slane %v345, %v512
        %v514 = vlaneseq
        %v515 = vshrl.u32 %v514, 7
        %v516 = vsub.s32 %v390, %v515
        %v517 = vrot.slane %v347, %v516
        %v518 = vsel %vm395, %v517, %v513
        %v519 = vlaneseq
        %v520 = vshrl.u32 %v519, 7
        %v521 = vsub.s32 %v397, %v520
        %v522 = vrot.slane %v349, %v521
        %v523 = vsel %vm402, %v522, %v518
        %v524 = vlaneseq
        %v525 = vshrl.u32 %v524, 7
        %v526 = vsub.s32 %v404, %v525
        %v527 = vrot.slane %v351, %v526
        %v528 = vsel %vm409, %v527, %v523
        %v529 = vlaneseq
        %v530 = vshrl.u32 %v529, 7
        %v531 = vsub.s32 %v385, %v530
        %v532 = vrot.slane %v353, %v531
        %v533 = vlaneseq
        %v534 = vshrl.u32 %v533, 7
        %v535 = vsub.s32 %v390, %v534
        %v536 = vrot.slane %v355, %v535
        %v537 = vsel %vm395, %v536, %v532
        %v538 = vlaneseq
        %v539 = vshrl.u32 %v538, 7
        %v540 = vsub.s32 %v397, %v539
        %v541 = vrot.slane %v357, %v540
        %v542 = vsel %vm402, %v541, %v537
        %v543 = vlaneseq
        %v544 = vshrl.u32 %v543, 7
        %v545 = vsub.s32 %v404, %v544
        %v546 = vrot.slane %v359, %v545
        %v547 = vsel %vm409, %v546, %v542
        %v548 = vlaneseq
        %v549 = vshrl.u32 %v548, 7
        %v550 = vsub.s32 %v385, %v549
        %v551 = vrot.slane %v361, %v550
        %v552 = vlaneseq
        %v553 = vshrl.u32 %v552, 7
        %v554 = vsub.s32 %v390, %v553
        %v555 = vrot.slane %v363, %v554
        %v556 = vsel %vm395, %v555, %v551
        %v557 = vlaneseq
        %v558 = vshrl.u32 %v557, 7
        %v559 = vsub.s32 %v397, %v558
        %v560 = vrot.slane %v365, %v559
        %v561 = vsel %vm402, %v560, %v556
        %v562 = vlaneseq
        %v563 = vshrl.u32 %v562, 7
        %v564 = vsub.s32 %v404, %v563
        %v565 = vrot.slane %v367, %v564
        %v566 = vsel %vm409, %v565, %v561
        %vm567 = vcmask 1045509
        %v568 = vsel %vm567, %v528, %v509
        %vm569 = vcmask 1046534
        %v570 = vsel %vm569, %v547, %v568
        %vm571 = vcmask 1047559
        %v572 = vsel %vm571, %v566, %v570
        %vm574 = vcmask 1043456
        %v575 = vsel %vm574, %v473, %v572
        %vm576 = vcmask 261120
        %v578 = vsel %vm576, %v575, 0
        %580 = vmatprep.subr.mxu0 0.0
        %581 = vmatpush1.msra.mxu0 %v250
        %582 = vmatprep.subr.mxu0 0.0
        %583 = vmatpush1.msra.mxu0 %v251
        %584 = vmatprep.subr.mxu0 0.0
        %585 = vmatpush1.msra.mxu0 %v252
        %586 = vmatprep.subr.mxu0 0.0
        %587 = vmatpush1.msra.mxu0 %v253
        %588 = vmatprep.subr.mxu0 0.0
        %589 = vmatpush1.msra.mxu0 0.0
        %590 = vmatprep.subr.mxu0 0.0
        %591 = vmatpush1.msra.mxu0 0.0
        %592 = vmatprep.subr.mxu0 0.0
        %593 = vmatpush1.msra.mxu0 0.0
        %594 = vmatprep.subr.mxu0 0.0
        %595 = vmatpush1.msra.mxu0 0.0
        %596 = vmatprep.subr.mxu0 0.0
        %597 = vmatpush1.msra.mxu0 0.0
        %598 = vmatprep.subr.mxu0 0.0
        %599 = vmatpush1.msra.mxu0 0.0
        %600 = vmatprep.subr.mxu0 0.0
        %601 = vmatpush1.msra.mxu0 0.0
        %602 = vmatprep.subr.mxu0 0.0
        %603 = vmatpush1.msra.mxu0 0.0
        %604 = vmatprep.subr.mxu0 0.0
        %605 = vmatpush1.msra.mxu0 0.0
        %606 = vmatprep.subr.mxu0 0.0
        %607 = vmatpush1.msra.mxu0 0.0
        %608 = vmatprep.subr.mxu0 0.0
        %609 = vmatpush1.msra.mxu0 0.0
        %610 = vmatprep.subr.mxu0 0.0
        %611 = vmatpush1.msra.mxu0 0.0
        %612 = vmatprep.subr.mxu0 0.0
        %613 = vmatpush1.msra.mxu0 0.0
        %614 = vmatprep.subr.mxu0 0.0
        %615 = vmatpush1.msra.mxu0 0.0
        %616 = vmatprep.subr.mxu0 0.0
        %617 = vmatpush1.msra.mxu0 0.0
        %618 = vmatprep.subr.mxu0 0.0
        %619 = vmatpush1.msra.mxu0 0.0
        %620 = vmatprep.subr.mxu0 0.0
        %621 = vmatpush1.msra.mxu0 0.0
        %622 = vmatprep.subr.mxu0 0.0
        %623 = vmatpush1.msra.mxu0 0.0
        %624 = vmatprep.subr.mxu0 0.0
        %625 = vmatpush1.msra.mxu0 0.0
        %626 = vmatprep.subr.mxu0 0.0
        %627 = vmatpush1.msra.mxu0 0.0
        %628 = vmatprep.subr.mxu0 0.0
        %629 = vmatpush1.msra.mxu0 0.0
        %630 = vmatprep.subr.mxu0 0.0
        %631 = vmatpush1.msra.mxu0 0.0
        %632 = vmatprep.subr.mxu0 0.0
        %633 = vmatpush1.msra.mxu0 0.0
        %634 = vmatprep.subr.mxu0 0.0
        %635 = vmatpush1.msra.mxu0 0.0
        %636 = vmatprep.subr.mxu0 0.0
        %637 = vmatpush1.msra.mxu0 0.0
        %638 = vmatprep.subr.mxu0 0.0
        %639 = vmatpush1.msra.mxu0 0.0
        %640 = vmatprep.subr.mxu0 0.0
        %641 = vmatpush1.msra.mxu0 0.0
        %642 = vmatprep.subr.mxu0 0.0
        %643 = vmatpush1.msra.mxu0 0.0
        %644 = vmatprep.mubr.f32.mxu0 0.0
        %645 = vmatmul.mubr.f32.gmra.mrb[0].mxu0 %v578
        %v646 = vpop.f32.mrb[0].mxu0
        %v647 = vadd.f32 0.0, %v646
        %v648 = vpop.f32.mrb[0].mxu0
        %649 = vdwg.mxu0
        %v650 = vmax.f32 %v647, 0.0
        %vm651 = vcmask 15360
        %v653 = vsel %vm651, %v650, 0
        %vm655 = vcmask 1041408
        %v657 = vsel %vm655, %v254, 0
        %659 = vmatprep.subr.mxu0 0.0
        %660 = vmatpush1.msra.mxu0 %v657
        %661 = vmatprep.subr.mxu0 0.0
        %662 = vmatpush1.msra.mxu0 0.0
        %663 = vmatprep.subr.mxu0 0.0
        %664 = vmatpush1.msra.mxu0 0.0
        %665 = vmatprep.subr.mxu0 0.0
        %666 = vmatpush1.msra.mxu0 0.0
        %667 = vmatprep.subr.mxu0 0.0
        %668 = vmatpush1.msra.mxu0 0.0
        %669 = vmatprep.subr.mxu0 0.0
        %670 = vmatpush1.msra.mxu0 0.0
        %671 = vmatprep.subr.mxu0 0.0
        %672 = vmatpush1.msra.mxu0 0.0
        %673 = vmatprep.subr.mxu0 0.0
        %674 = vmatpush1.msra.mxu0 0.0
        %675 = vmatprep.subr.mxu0 0.0
        %676 = vmatpush1.msra.mxu0 0.0
        %677 = vmatprep.subr.mxu0 0.0
        %678 = vmatpush1.msra.mxu0 0.0
        %679 = vmatprep.subr.mxu0 0.0
        %680 = vmatpush1.msra.mxu0 0.0
        %681 = vmatprep.subr.mxu0 0.0
        %682 = vmatpush1.msra.mxu0 0.0
        %683 = vmatprep.subr.mxu0 0.0
        %684 = vmatpush1.msra.mxu0 0.0
        %685 = vmatprep.subr.mxu0 0.0
        %686 = vmatpush1.msra.mxu0 0.0
        %687 = vmatprep.subr.mxu0 0.0
        %688 = vmatpush1.msra.mxu0 0.0
        %689 = vmatprep.subr.mxu0 0.0
        %690 = vmatpush1.msra.mxu0 0.0
        %691 = vmatprep.subr.mxu0 0.0
        %692 = vmatpush1.msra.mxu0 0.0
        %693 = vmatprep.subr.mxu0 0.0
        %694 = vmatpush1.msra.mxu0 0.0
        %695 = vmatprep.subr.mxu0 0.0
        %696 = vmatpush1.msra.mxu0 0.0
        %697 = vmatprep.subr.mxu0 0.0
        %698 = vmatpush1.msra.mxu0 0.0
        %699 = vmatprep.subr.mxu0 0.0
        %700 = vmatpush1.msra.mxu0 0.0
        %701 = vmatprep.subr.mxu0 0.0
        %702 = vmatpush1.msra.mxu0 0.0
        %703 = vmatprep.subr.mxu0 0.0
        %704 = vmatpush1.msra.mxu0 0.0
        %705 = vmatprep.subr.mxu0 0.0
        %706 = vmatpush1.msra.mxu0 0.0
        %707 = vmatprep.subr.mxu0 0.0
        %708 = vmatpush1.msra.mxu0 0.0
        %709 = vmatprep.subr.mxu0 0.0
        %710 = vmatpush1.msra.mxu0 0.0
        %711 = vmatprep.subr.mxu0 0.0
        %712 = vmatpush1.msra.mxu0 0.0
        %713 = vmatprep.subr.mxu0 0.0
        %714 = vmatpush1.msra.mxu0 0.0
        %715 = vmatprep.subr.mxu0 0.0
        %716 = vmatpush1.msra.mxu0 0.0
        %717 = vmatprep.subr.mxu0 0.0
        %718 = vmatpush1.msra.mxu0 0.0
        %719 = vmatprep.subr.mxu0 0.0
        %720 = vmatpush1.msra.mxu0 0.0
        %721 = vmatprep.subr.mxu0 0.0
        %722 = vmatpush1.msra.mxu0 0.0
        %723 = vmatprep.mubr.f32.mxu0 0.0
        %724 = vmatmul.mubr.f32.gmra.mrb[0].mxu0 %v653
        %v725 = vpop.f32.mrb[0].mxu0
        %v726 = vadd.f32 0.0, %v725
        %v727 = vpop.f32.mrb[0].mxu0
        %728 = vdwg.mxu0
        %v730 = vrot.slane %v726, 4
        %v732 = vadd.f32 %v726, %v730
        %v733 = vxor.u32 %v732, 2147483648
        %v734 = vmul.f32 %v733, 1.442695
        %v735 = vpow.pop %v734
        %v736 = vadd.f32 %v735, 1.0
        %v737 = vrcp.pop %v736
        %v738 = vmul.f32 1.0, %v737
        %v739 = vlaneseq
        %v740 = vshrl.u32 %v739, 7
        %v741 = vsub.s32 0, %v740
        %v742 = vrot.slane %v738, %v741
        %744 = vbcast.lane.b32.xlu0 %v742, 256
        %v745 = vpop.permute.xlu0 %744
        %s747 = sor.u32 256, 8
        %748 = vbcast.lane.b32.xlu0 %v742, %s747
        %v749 = vpop.permute.xlu0 %748
        %s751 = sor.u32 256, 16
        %752 = vbcast.lane.b32.xlu0 %v742, %s751
        %v753 = vpop.permute.xlu0 %752
        %s755 = sor.u32 256, 24
        %756 = vbcast.lane.b32.xlu0 %v742, %s755
        %v757 = vpop.permute.xlu0 %756
        %v758 = vlaneseq
        %v759 = vshrl.u32 %v758, 7
        %v760 = vsub.s32 1, %v759
        %v761 = vrot.slane %v738, %v760
        %763 = vbcast.lane.b32.xlu0 %v761, 256
        %v764 = vpop.permute.xlu0 %763
        %s766 = sor.u32 256, 8
        %767 = vbcast.lane.b32.xlu0 %v761, %s766
        %v768 = vpop.permute.xlu0 %767
        %s770 = sor.u32 256, 16
        %771 = vbcast.lane.b32.xlu0 %v761, %s770
        %v772 = vpop.permute.xlu0 %771
        %s774 = sor.u32 256, 24
        %775 = vbcast.lane.b32.xlu0 %v761, %s774
        %v776 = vpop.permute.xlu0 %775
        %v777 = vlaneseq
        %v778 = vshrl.u32 %v777, 7
        %v779 = vsub.s32 2, %v778
        %v780 = vrot.slane %v738, %v779
        %782 = vbcast.lane.b32.xlu0 %v780, 256
        %v783 = vpop.permute.xlu0 %782
        %s785 = sor.u32 256, 8
        %786 = vbcast.lane.b32.xlu0 %v780, %s785
        %v787 = vpop.permute.xlu0 %786
        %s789 = sor.u32 256, 16
        %790 = vbcast.lane.b32.xlu0 %v780, %s789
        %v791 = vpop.permute.xlu0 %790
        %s793 = sor.u32 256, 24
        %794 = vbcast.lane.b32.xlu0 %v780, %s793
        %v795 = vpop.permute.xlu0 %794
        %v796 = vlaneseq
        %v797 = vshrl.u32 %v796, 7
        %v798 = vsub.s32 3, %v797
        %v799 = vrot.slane %v738, %v798
        %801 = vbcast.lane.b32.xlu0 %v799, 256
        %v802 = vpop.permute.xlu0 %801
        %s804 = sor.u32 256, 8
        %805 = vbcast.lane.b32.xlu0 %v799, %s804
        %v806 = vpop.permute.xlu0 %805
        %s808 = sor.u32 256, 16
        %809 = vbcast.lane.b32.xlu0 %v799, %s808
        %v810 = vpop.permute.xlu0 %809
        %s812 = sor.u32 256, 24
        %813 = vbcast.lane.b32.xlu0 %v799, %s812
        %v814 = vpop.permute.xlu0 %813
        %v815 = vmul.f32 %v234, %v745
        %v816 = vmul.f32 %v235, %v749
        %v817 = vmul.f32 %v236, %v753
        %v818 = vmul.f32 %v237, %v757
        %v819 = vmul.f32 %v238, %v764
        %v820 = vmul.f32 %v239, %v768
        %v821 = vmul.f32 %v240, %v772
        %v822 = vmul.f32 %v241, %v776
        %v823 = vmul.f32 %v242, %v783
        %v824 = vmul.f32 %v243, %v787
        %v825 = vmul.f32 %v244, %v791
        %v826 = vmul.f32 %v245, %v795
        %v827 = vmul.f32 %v246, %v802
        %v828 = vmul.f32 %v247, %v806
        %v829 = vmul.f32 %v248, %v810
        %v830 = vmul.f32 %v249, %v814
        %v831 = vadd.f32 %v815, %v816
        %v832 = vadd.f32 %v831, %v817
        %v833 = vadd.f32 %v832, %v818
        %v834 = vrot.slane %v833, 4
        %v835 = vadd.f32 %v833, %v834
        %v836 = vrot.slane %v835, 2
        %v837 = vadd.f32 %v835, %v836
        %v838 = vrot.slane %v837, 1
        %v839 = vadd.f32 %v837, %v838
        %v840 = vadd.f32 %v819, %v820
        %v841 = vadd.f32 %v840, %v821
        %v842 = vadd.f32 %v841, %v822
        %v843 = vrot.slane %v842, 4
        %v844 = vadd.f32 %v842, %v843
        %v845 = vrot.slane %v844, 2
        %v846 = vadd.f32 %v844, %v845
        %v847 = vrot.slane %v846, 1
        %v848 = vadd.f32 %v846, %v847
        %v849 = vadd.f32 %v823, %v824
        %v850 = vadd.f32 %v849, %v825
        %v851 = vadd.f32 %v850, %v826
        %v852 = vrot.slane %v851, 4
        %v853 = vadd.f32 %v851, %v852
        %v854 = vrot.slane %v853, 2
        %v855 = vadd.f32 %v853, %v854
        %v856 = vrot.slane %v855, 1
        %v857 = vadd.f32 %v855, %v856
        %v858 = vadd.f32 %v827, %v828
        %v859 = vadd.f32 %v858, %v829
        %v860 = vadd.f32 %v859, %v830
        %v861 = vrot.slane %v860, 4
        %v862 = vadd.f32 %v860, %v861
        %v863 = vrot.slane %v862, 2
        %v864 = vadd.f32 %v862, %v863
        %v865 = vrot.slane %v864, 1
        %v866 = vadd.f32 %v864, %v865
        %v867 = vrcp.pop 32.0
        %v868 = vmul.f32 %v839, %v867
        %v869 = vmul.f32 %v848, %v867
        %v870 = vmul.f32 %v857, %v867
        %v871 = vmul.f32 %v866, %v867
        %v872 = vmax.f32 %v815, %v816
        %v873 = vmax.f32 %v872, %v817
        %v874 = vmax.f32 %v873, %v818
        %v875 = vrot.slane %v874, 4
        %v876 = vmax.f32 %v874, %v875
        %v877 = vrot.slane %v876, 2
        %v878 = vmax.f32 %v876, %v877
        %v879 = vrot.slane %v878, 1
        %v880 = vmax.f32 %v878, %v879
        %v881 = vmax.f32 %v819, %v820
        %v882 = vmax.f32 %v881, %v821
        %v883 = vmax.f32 %v882, %v822
        %v884 = vrot.slane %v883, 4
        %v885 = vmax.f32 %v883, %v884
        %v886 = vrot.slane %v885, 2
        %v887 = vmax.f32 %v885, %v886
        %v888 = vrot.slane %v887, 1
        %v889 = vmax.f32 %v887, %v888
        %v890 = vmax.f32 %v823, %v824
        %v891 = vmax.f32 %v890, %v825
        %v892 = vmax.f32 %v891, %v826
        %v893 = vrot.slane %v892, 4
        %v894 = vmax.f32 %v892, %v893
        %v895 = vrot.slane %v894, 2
        %v896 = vmax.f32 %v894, %v895
        %v897 = vrot.slane %v896, 1
        %v898 = vmax.f32 %v896, %v897
        %v899 = vmax.f32 %v827, %v828
        %v900 = vmax.f32 %v899, %v829
        %v901 = vmax.f32 %v900, %v830
        %v902 = vrot.slane %v901, 4
        %v903 = vmax.f32 %v901, %v902
        %v904 = vrot.slane %v903, 2
        %v905 = vmax.f32 %v903, %v904
        %v906 = vrot.slane %v905, 1
        %v907 = vmax.f32 %v905, %v906
        %v912 = vsel %vm468, %v869, %v868
        %v913 = vsel %vm470, %v870, %v912
        %v914 = vsel %vm472, %v871, %v913
        %v920 = vsel %vm468, %v889, %v880
        %v921 = vsel %vm470, %v898, %v920
        %v922 = vsel %vm472, %v907, %v921
        %924 = vmatprep.subr.mxu0 0.0
        %925 = vmatpush1.msra.mxu0 %v255
        %926 = vmatprep.subr.mxu0 0.0
        %927 = vmatpush1.msra.mxu0 %v256
        %928 = vmatprep.subr.mxu0 0.0
        %929 = vmatpush1.msra.mxu0 %v257
        %930 = vmatprep.subr.mxu0 0.0
        %931 = vmatpush1.msra.mxu0 %v258
        %932 = vmatprep.subr.mxu0 0.0
        %933 = vmatpush1.msra.mxu0 %v259
        %934 = vmatprep.subr.mxu0 0.0
        %935 = vmatpush1.msra.mxu0 %v260
        %936 = vmatprep.subr.mxu0 0.0
        %937 = vmatpush1.msra.mxu0 %v261
        %938 = vmatprep.subr.mxu0 0.0
        %939 = vmatpush1.msra.mxu0 %v262
        %940 = vmatprep.subr.mxu0 0.0
        %941 = vmatpush1.msra.mxu0 %v263
        %942 = vmatprep.subr.mxu0 0.0
        %943 = vmatpush1.msra.mxu0 %v264
        %944 = vmatprep.subr.mxu0 0.0
        %945 = vmatpush1.msra.mxu0 %v265
        %946 = vmatprep.subr.mxu0 0.0
        %947 = vmatpush1.msra.mxu0 %v266
        %948 = vmatprep.subr.mxu0 0.0
        %949 = vmatpush1.msra.mxu0 %v267
        %950 = vmatprep.subr.mxu0 0.0
        %951 = vmatpush1.msra.mxu0 %v268
        %952 = vmatprep.subr.mxu0 0.0
        %953 = vmatpush1.msra.mxu0 %v269
        %954 = vmatprep.subr.mxu0 0.0
        %955 = vmatpush1.msra.mxu0 %v270
        %956 = vmatprep.subr.mxu0 0.0
        %957 = vmatpush1.msra.mxu0 %v271
        %958 = vmatprep.subr.mxu0 0.0
        %959 = vmatpush1.msra.mxu0 %v272
        %960 = vmatprep.subr.mxu0 0.0
        %961 = vmatpush1.msra.mxu0 %v273
        %962 = vmatprep.subr.mxu0 0.0
        %963 = vmatpush1.msra.mxu0 %v274
        %964 = vmatprep.subr.mxu0 0.0
        %965 = vmatpush1.msra.mxu0 %v275
        %966 = vmatprep.subr.mxu0 0.0
        %967 = vmatpush1.msra.mxu0 %v276
        %968 = vmatprep.subr.mxu0 0.0
        %969 = vmatpush1.msra.mxu0 %v277
        %970 = vmatprep.subr.mxu0 0.0
        %971 = vmatpush1.msra.mxu0 %v278
        %972 = vmatprep.subr.mxu0 0.0
        %973 = vmatpush1.msra.mxu0 %v279
        %974 = vmatprep.subr.mxu0 0.0
        %975 = vmatpush1.msra.mxu0 %v280
        %976 = vmatprep.subr.mxu0 0.0
        %977 = vmatpush1.msra.mxu0 %v281
        %978 = vmatprep.subr.mxu0 0.0
        %979 = vmatpush1.msra.mxu0 %v282
        %980 = vmatprep.subr.mxu0 0.0
        %981 = vmatpush1.msra.mxu0 %v283
        %982 = vmatprep.subr.mxu0 0.0
        %983 = vmatpush1.msra.mxu0 %v284
        %984 = vmatprep.subr.mxu0 0.0
        %985 = vmatpush1.msra.mxu0 %v285
        %986 = vmatprep.subr.mxu0 0.0
        %987 = vmatpush1.msra.mxu0 %v286
        %988 = vmatprep.mubr.f32.mxu0 %v922
        %989 = vmatmul.mubr.f32.gmra.mrb[0].mxu0 %v914
        %v990 = vpop.f32.mrb[0].mxu0
        %v991 = vadd.f32 0.0, %v990
        %v992 = vpop.f32.mrb[0].mxu0
        %993 = vdwg.mxu0
        %v994 = vxor.u32 %v991, 2147483648
        %v995 = vmul.f32 %v994, 1.442695
        %v996 = vpow.pop %v995
        %v997 = vadd.f32 %v996, 1.0
        %v998 = vrcp.pop %v997
        %v999 = vmul.f32 1.0, %v998
        %v1002 = vunpack.c.l.s4 1966171168
        %v1003 = vunpack.c.0.s8 %v1002
        %v1004 = vlaneseq
        %v1005 = vshrl.u32 %v1004, 7
        %v1006 = vsub.s32 %v1003, %v1005
        %v1007 = vrot.slane %v999, %v1006
        %v1008 = vcombine.high %v1007, %v1007
        %v1010 = vunpack.c.l.s4 1966171168
        %v1011 = vunpack.c.0.s8 %v1010
        %v1012 = vlaneseq
        %v1013 = vshrl.u32 %v1012, 7
        %v1014 = vsub.s32 %v1011, %v1013
        %v1015 = vrot.slane %v1007, %v1014
        %v1017 = vunpack.c.l.s4 1966171168
        %v1018 = vunpack.c.0.s8 %v1017
        %v1019 = vlaneseq
        %v1020 = vshrl.u32 %v1019, 7
        %v1021 = vsub.s32 %v1018, %v1020
        %v1022 = vrot.slane %v1008, %v1021
        %v1023 = vcombine.high %v1015, %v1015
        %v1024 = vcombine.high %v1022, %v1022
        %v1025 = vlaneseq
        %v1026 = vshrl.u32 %v1025, 7
        %v1027 = vsub.s32 0, %v1026
        %v1028 = vrot.slane %v1015, %v1027
        %v1029 = vlaneseq
        %v1030 = vshrl.u32 %v1029, 7
        %v1031 = vsub.s32 0, %v1030
        %v1032 = vrot.slane %v1022, %v1031
        %v1033 = vlaneseq
        %v1034 = vshrl.u32 %v1033, 7
        %v1035 = vsub.s32 0, %v1034
        %v1036 = vrot.slane %v1023, %v1035
        %v1037 = vlaneseq
        %v1038 = vshrl.u32 %v1037, 7
        %v1039 = vsub.s32 0, %v1038
        %v1040 = vrot.slane %v1024, %v1039
        %v1045 = vmul.f32 %v815, %v1028
        %v1046 = vmul.f32 %v816, %v1028
        %v1047 = vmul.f32 %v817, %v1028
        %v1048 = vmul.f32 %v818, %v1028
        %v1049 = vmul.f32 %v819, %v1032
        %v1050 = vmul.f32 %v820, %v1032
        %v1051 = vmul.f32 %v821, %v1032
        %v1052 = vmul.f32 %v822, %v1032
        %v1053 = vmul.f32 %v823, %v1036
        %v1054 = vmul.f32 %v824, %v1036
        %v1055 = vmul.f32 %v825, %v1036
        %v1056 = vmul.f32 %v826, %v1036
        %v1057 = vmul.f32 %v827, %v1040
        %v1058 = vmul.f32 %v828, %v1040
        %v1059 = vmul.f32 %v829, %v1040
        %v1060 = vmul.f32 %v830, %v1040
        %1061 = vst [vmem:[%s231] sm:$0xff] %v1045
        %1062 = vst [vmem:[%s231 + $0x8] sm:$0xff] %v1046
        %1063 = vst [vmem:[%s231 + $0x10] sm:$0xff] %v1047
        %1064 = vst [vmem:[%s231 + $0x18] sm:$0xff] %v1048
        %1065 = vst [vmem:[%s231 + $0x20] sm:$0xff] %v1049
        %1066 = vst [vmem:[%s231 + $0x28] sm:$0xff] %v1050
        %1067 = vst [vmem:[%s231 + $0x30] sm:$0xff] %v1051
        %1068 = vst [vmem:[%s231 + $0x38] sm:$0xff] %v1052
        %1069 = vst [vmem:[%s231 + $0x40] sm:$0xff] %v1053
        %1070 = vst [vmem:[%s231 + $0x48] sm:$0xff] %v1054
        %1071 = vst [vmem:[%s231 + $0x50] sm:$0xff] %v1055
        %1072 = vst [vmem:[%s231 + $0x58] sm:$0xff] %v1056
        %1073 = vst [vmem:[%s231 + $0x60] sm:$0xff] %v1057
        %1074 = vst [vmem:[%s231 + $0x68] sm:$0xff] %v1058
        %1075 = vst [vmem:[%s231 + $0x70] sm:$0xff] %v1059
        %1076 = vst [vmem:[%s231 + $0x78] sm:$0xff] %v1060
        %s1077 = sand.u32 %s119, 1
        %s1078 = scalar_lea.sflag [#allocation4], %s1077
        %s1079 = sand.u32 %s119, 1
        %s1080 = smul.addr %s1079, 128
        %s1081 = scalar_lea.vmem [#allocation7], %s1080
        // Predicated region
        $region45: #{tpu_custom_call.1} parent=35 // pred_check
          %p1082 = pneg %p129
        $region46: #{tpu_custom_call.1} parent=35 // pred_check_branch
          %1084 = sbr.rel (%p1082) target = $region48
        $region47: #{tpu_custom_call.1} parent=35 // pred_region
          %s1085 = smul.u32 4, %s22
          %s1087 = ssub.s32 2048, 2048
          %1088 = vsyncadd %s1078, %s1087
          %s1089 = smul.addr %s1085, 4
          %s1090 = smul.addr %s1089, 128
          %s1091 = scalar_lea.hbm %s4, %s1090
          %s1092 = sshll.u32 %s1081, 4
          %s1093 = int_to_ptr.vmem [resolvable:$true] %s1092
          %1098 = dma.vmem_to_hbm [thread:$0]  %s1093, 2048, %s1091, %s1078, 128, 128, 8
        $region48: #{tpu_custom_call.1} parent=35 // pred_fallthru
          _
      $region36: #{tpu_custom_call.1} parent=5 // pred_fallthru
        _
      %p1099 = scmp.le.s32.totalorder 2, %s17
      // Predicated region
      $region49: #{tpu_custom_call.1} parent=5 // pred_check
        %p1100 = pneg %p1099
      $region50: #{tpu_custom_call.1} parent=5 // pred_check_branch
        %1102 = sbr.rel (%p1100) target = $region52
      $region51: #{tpu_custom_call.1} parent=5 // pred_region
        %s1103 = ssub.s32 %s17, 2
        // Predicated region
        $region53: #{tpu_custom_call.1} parent=51 // pred_check
          %p1104 = pneg %p135
        $region54: #{tpu_custom_call.1} parent=51 // pred_check_branch
          %1106 = sbr.rel (%p1104) target = $region56
        $region55: #{tpu_custom_call.1} parent=51 // pred_region
          %s1107 = sand.u32 %s120, 1
          %s1108 = scalar_lea.sflag [#allocation4], %s1107
          %s1109 = sand.u32 %s120, 1
          %s1110 = smul.addr %s1109, 128
          %s1111 = scalar_lea.vmem [#allocation7], %s1110
          %1112 = dma.done %s1108, 2048
        $region56: #{tpu_custom_call.1} parent=51 // pred_fallthru
          _
      $region52: #{tpu_custom_call.1} parent=5 // pred_fallthru
        _
    $region6: #{tpu_custom_call.1} parent=1 // loop_footer
      %s21 = sadd.s32 1, %s17
    $region7: #{tpu_custom_call.1} parent=1 // loop_footer_branch
      %16 = sbr.rel target = $region3
    $region8: #{tpu_custom_call.1} parent=1 // loop_exit
      _
    %1113 = vsyncpa [#allocation3], 1
    %s1114 = scalar_lea.sflag [#allocation3], 1
    %1115 = vsyncpa %s1114, 1
    %1116 = vsyncpa [#allocation6], 1
    %1117 = vsyncpa [#allocation4], 1
    %s1118 = scalar_lea.sflag [#allocation4], 1
    %1119 = vsyncpa %s1118, 1

</llo_original>
